<compile_context>
chip_gen: v5e
topology: v5e:2x2
jax: 0.10.0
libtpu: 0.0.40
codegen_flags: <defaults>
</compile_context>

<pallas_src>
import functools

import jax
import jax.numpy as jnp
from jax.experimental import pallas as pl
from jax.experimental.pallas import tpu as pltpu

BN_EPS = 1e-5
HIDDEN = 64          # real hidden width (PyTorch module)
DP = 128             # padded input-feature width
HP = 128             # padded hidden width
NP = 128             # padded output width
WCOLS = 3 * HP       # packed weight slab: [w1p | w2p | w3p]


# --------------------------------------------------------------------------
# Kernels
# --------------------------------------------------------------------------
def mlp_kernel_single(x_ref, w_ref, p_ref, out_ref, *, b_real):
    """Single-shot path (whole batch in one VMEM block).

    x: [Bp, 128]; w: [128, 384] = [w1|w2|w3]; p: [8,128] packed params.
    p rows: 0=g1, 1=be1, 2=g2, 3=be2, 4=b3 (zero-padded to 128 lanes).
    """
    x = x_ref[...]
    w1 = w_ref[:, 0:HP]
    w2 = w_ref[:, HP:2 * HP]
    w3 = w_ref[:, 2 * HP:3 * HP]
    p = p_ref[...]
    g1, be1, g2, be2, b3 = p[0:1, :], p[1:2, :], p[2:3, :], p[3:4, :], p[4:5, :]

    bp = x.shape[0]
    if bp == b_real:
        mask = None
    else:  # batch was padded up to a sublane multiple; exclude pad rows from stats
        rows = jax.lax.broadcasted_iota(jnp.int32, (bp, HP), 0)
        mask = rows < b_real
    inv_n = 1.0 / float(b_real)

    def bn_relu(h, g, be):
        hm = h if mask is None else jnp.where(mask, h, 0.0)
        mu = jnp.sum(hm, axis=0, keepdims=True) * inv_n
        var = jnp.sum(hm * hm, axis=0, keepdims=True) * inv_n - mu * mu
        var = jnp.maximum(var, 0.0)                      # guard fp cancellation
        a = g * jax.lax.rsqrt(var + BN_EPS)              # EUP rsqrt
        b = be - mu * a
        return jnp.maximum(h * a + b, 0.0)               # fused scale+shift+ReLU

    h = bn_relu(jnp.dot(x, w1, preferred_element_type=jnp.float32), g1, be1)
    h = bn_relu(jnp.dot(h, w2, preferred_element_type=jnp.float32), g2, be2)
    out_ref[...] = jnp.dot(h, w3, preferred_element_type=jnp.float32) + b3


def mlp_kernel_grid(x_ref, w_ref, p_ref, out_ref, stats_ref, *, b_real, batch_tile):
    """3-phase batch-grid path for large B (full-batch BN statistics).

    grid = (3, n_tiles).  Phase 0: accumulate layer-1 sum / sumsq.
    Phase 1: recompute layer 1, apply BN1+ReLU, accumulate layer-2 stats.
    Phase 2: recompute both layers, apply BN2+ReLU, write output.
    stats_ref rows: 0=sum1, 1=sumsq1, 2=sum2, 3=sumsq2.
    """
    phase = pl.program_id(0)
    i = pl.program_id(1)

    @pl.when(jnp.logical_and(phase == 0, i == 0))
    def _():
        stats_ref[...] = jnp.zeros_like(stats_ref)

    x = x_ref[...]
    w1 = w_ref[:, 0:HP]
    w2 = w_ref[:, HP:2 * HP]
    w3 = w_ref[:, 2 * HP:3 * HP]
    p = p_ref[...]
    g1, be1, g2, be2, b3 = p[0:1, :], p[1:2, :], p[2:3, :], p[3:4, :], p[4:5, :]

    rows = jax.lax.broadcasted_iota(jnp.int32, (batch_tile, HP), 0) + i * batch_tile
    mask = rows < b_real
    inv_n = 1.0 / float(b_real)

    def layer1():
        return jnp.dot(x, w1, preferred_element_type=jnp.float32)

    def fold(sum_row, sq_row, g, be):
        mu = stats_ref[sum_row:sum_row + 1, :] * inv_n
        var = jnp.maximum(stats_ref[sq_row:sq_row + 1, :] * inv_n - mu * mu, 0.0)
        a = g * jax.lax.rsqrt(var + BN_EPS)
        return a, be - mu * a

    @pl.when(phase == 0)
    def _():
        h = jnp.where(mask, layer1(), 0.0)
        stats_ref[0:1, :] += jnp.sum(h, axis=0, keepdims=True)
        stats_ref[1:2, :] += jnp.sum(h * h, axis=0, keepdims=True)

    @pl.when(phase == 1)
    def _():
        a1, c1 = fold(0, 1, g1, be1)
        z1 = jnp.maximum(layer1() * a1 + c1, 0.0)
        h2 = jnp.dot(z1, w2, preferred_element_type=jnp.float32)
        h2 = jnp.where(mask, h2, 0.0)
        stats_ref[2:3, :] += jnp.sum(h2, axis=0, keepdims=True)
        stats_ref[3:4, :] += jnp.sum(h2 * h2, axis=0, keepdims=True)

    @pl.when(phase == 2)
    def _():
        a1, c1 = fold(0, 1, g1, be1)
        z1 = jnp.maximum(layer1() * a1 + c1, 0.0)
        a2, c2 = fold(2, 3, g2, be2)
        z2 = jnp.maximum(
            jnp.dot(z1, w2, preferred_element_type=jnp.float32) * a2 + c2, 0.0)
        out_ref[...] = jnp.dot(z2, w3, preferred_element_type=jnp.float32) + b3

    @pl.when(phase < 2)
    def _():
        # Output block is revisited each phase; keep phases 0/1 deterministic.
        out_ref[...] = jnp.zeros_like(out_ref)


# --------------------------------------------------------------------------
# Packing & wrappers
# --------------------------------------------------------------------------
def pack_params(params):
    """Pad weights to 128-wide tiles, pack into one slab + one param slab."""
    f32 = jnp.float32
    w1 = params["w1"].astype(f32)          # [D, 64]
    w2 = params["w2"].astype(f32)          # [64, 64]
    w3 = params["w3"].astype(f32)          # [64, n_out]
    D = w1.shape[0]
    n_out = w3.shape[1]
    assert D <= DP and n_out <= NP, "input/output dim exceeds padded tile width"

    w1p = jnp.zeros((DP, HP), f32).at[:D, :HIDDEN].set(w1)
    w2p = jnp.zeros((HP, HP), f32).at[:HIDDEN, :HIDDEN].set(w2)
    w3p = jnp.zeros((HP, NP), f32).at[:HIDDEN, :n_out].set(w3)
    wslab = jnp.concatenate([w1p, w2p, w3p], axis=1)        # [128, 384]

    pk = jnp.zeros((8, NP), f32)
    pk = pk.at[0, :HIDDEN].set(params["g1"].reshape(-1).astype(f32))
    pk = pk.at[1, :HIDDEN].set(params["be1"].reshape(-1).astype(f32))
    pk = pk.at[2, :HIDDEN].set(params["g2"].reshape(-1).astype(f32))
    pk = pk.at[3, :HIDDEN].set(params["be2"].reshape(-1).astype(f32))
    pk = pk.at[4, :n_out].set(params["b3"].reshape(-1).astype(f32))

    return {"wslab": wslab, "pk": pk, "n_out": n_out, "input_dim": D}


def _forward_single(xp, packed, b_real):
    B = xp.shape[0]
    Bp = max(8, ((B + 7) // 8) * 8)
    if Bp != B:
        xp = jnp.pad(xp, ((0, Bp - B), (0, 0)))
    vmem = pl.BlockSpec(memory_space=pltpu.MemorySpace.VMEM)
    cost = pl.CostEstimate(
        flops=2 * Bp * DP * HP * 3,
        transcendentals=2 * HP,
        bytes_accessed=4 * (Bp * DP + DP * WCOLS + 8 * NP + Bp * NP))
    return pl.pallas_call(
        functools.partial(mlp_kernel_single, b_real=b_real),
        out_shape=jax.ShapeDtypeStruct((Bp, NP), jnp.float32),
        in_specs=[vmem, vmem, vmem],
        out_specs=vmem,
        compiler_params=pltpu.CompilerParams(vmem_limit_bytes=32 << 20),
        cost_estimate=cost,
    )(xp, packed["wslab"], packed["pk"])


def _forward_grid(xp, packed, b_real, batch_tile):
    B = xp.shape[0]
    nb = (B + batch_tile - 1) // batch_tile
    Bp = nb * batch_tile
    if Bp != B:
        xp = jnp.pad(xp, ((0, Bp - B), (0, 0)))
    cost = pl.CostEstimate(
        flops=2 * Bp * DP * HP * 6,
        transcendentals=6 * HP,
        bytes_accessed=4 * (3 * Bp * DP + DP * WCOLS + 8 * NP + 3 * Bp * NP))
    return pl.pallas_call(
        functools.partial(mlp_kernel_grid, b_real=b_real, batch_tile=batch_tile),
        out_shape=jax.ShapeDtypeStruct((Bp, NP), jnp.float32),
        grid_spec=pltpu.PrefetchScalarGridSpec(
            num_scalar_prefetch=0,
            grid=(3, nb),                                   # phase outer, tiles inner
            in_specs=[
                pl.BlockSpec((batch_tile, DP), lambda p, i: (i, 0)),
                pl.BlockSpec((DP, WCOLS), lambda p, i: (0, 0)),   # weights resident
                pl.BlockSpec((8, NP), lambda p, i: (0, 0)),
            ],
            out_specs=pl.BlockSpec((batch_tile, NP), lambda p, i: (i, 0)),
            scratch_shapes=[pltpu.VMEM((8, HP), jnp.float32)],    # BN stat accumulators
        ),
        compiler_params=pltpu.CompilerParams(
            dimension_semantics=("arbitrary", "arbitrary"),
            vmem_limit_bytes=32 << 20,                      # v7x-safe (64 MiB VMEM)
        ),
        cost_estimate=cost,
    )(xp, packed["wslab"], packed["pk"])


def neural_network_model(x, packed, *, batch_tile=512):
    """x: [B, input_dim] float32.  packed: output of pack_params()."""
    x = x.astype(jnp.float32)
    B, D = x.shape
    assert D == packed["input_dim"]
    xp = jnp.zeros((B, DP), jnp.float32).at[:, :D].set(x)   # lane-dense x tile
    if B <= batch_tile:
        out = _forward_single(xp, packed, B)
    else:
        out = _forward_grid(xp, packed, B, batch_tile)
    return out[:B, :packed["n_out"]]


# --------------------------------------------------------------------------
# Reference (plain JAX, full PyTorch semantics incl. b1/b2 and training BN)
# --------------------------------------------------------------------------
def init_params(key, input_dim, hidden=HIDDEN, n_out=3):
    ks = jax.random.split(key, 6)

    def linear(kw, kb, fan_in, fan_out):
        bound = 1.0 / jnp.sqrt(float(fan_in))
        w = jax.random.uniform(kw, (fan_in, fan_out), jnp.float32, -bound, bound)
        b = jax.random.uniform(kb, (fan_out,), jnp.float32, -bound, bound)
        return w, b

    w1, b1 = linear(ks[0], ks[1], input_dim, hidden)
    w2, b2 = linear(ks[2], ks[3], hidden, hidden)
    w3, b3 = linear(ks[4], ks[5], hidden, n_out)
    ones = jnp.ones((hidden,), jnp.float32)
    zeros = jnp.zeros((hidden,), jnp.float32)
    return dict(w1=w1, b1=b1, g1=ones, be1=zeros,
                w2=w2, b2=b2, g2=ones, be2=zeros,
                w3=w3, b3=b3)


def reference_forward(x, p):
    def bn_relu(h, g, be):
        mu = jnp.mean(h, axis=0, keepdims=True)
        var = jnp.mean((h - mu) ** 2, axis=0, keepdims=True)   # biased (training-mode)
        return jnp.maximum((h - mu) / jnp.sqrt(var + BN_EPS) * g + be, 0.0)

    h = bn_relu(x @ p["w1"] + p["b1"], p["g1"], p["be1"])
    h = bn_relu(h @ p["w2"] + p["b2"], p["g2"], p["be2"])
    return h @ p["w3"] + p["b3"]


# --------------------------------------------------------------------------
if __name__ == "__main__":
    key = jax.random.PRNGKey(0)
    k_x, k_p, k_x2 = jax.random.split(key, 3)

    input_dim = 32
    params = init_params(k_p, input_dim)
    packed = pack_params(params)

    # 1) Small batch -> single-shot path (one VMEM block, no grid).
    x_small = jax.random.normal(k_x, (8, input_dim), jnp.float32)
    out_small = jax.block_until_ready(neural_network_model(x_small, packed))
    ref_small = reference_forward(x_small, params)
    assert out_small.shape == (8, 3)
    assert jnp.allclose(out_small, ref_small, atol=1e-4, rtol=1e-4)

    # 2) Larger batch -> 3-phase batch-grid path (4 tiles of 64, ragged last
    #    tile masked; full-batch BN stats accumulated in VMEM scratch).
    x_big = jax.random.normal(k_x2, (200, input_dim), jnp.float32)
    out_big = jax.block_until_ready(
        neural_network_model(x_big, packed, batch_tile=64))
    ref_big = reference_forward(x_big, params)
    assert out_big.shape == (200, 3)
    assert jnp.allclose(out_big, ref_big, atol=1e-4, rtol=1e-4)

    print("KERNEL_OK")
</pallas_src>

<mosaic_0001>
module attributes {stable_mosaic.version = 11 : i64} {
  func.func @mlp_kernel_single(%arg0: memref<8x128xf32, #tpu.memory_space<vmem>>, %arg1: memref<128x384xf32, #tpu.memory_space<vmem>>, %arg2: memref<8x128xf32, #tpu.memory_space<vmem>>, %arg3: memref<8x128xf32, #tpu.memory_space<vmem>>) attributes {dimension_semantics = [], scalar_prefetch = 0 : i64, scratch_operands = 0 : i64, tpu.core_type = #tpu.core_type<tc>} {
    %c0 = arith.constant 0 : index
    %c0_0 = arith.constant 0 : index
    %0 = vector.load %arg0[%c0, %c0_0] : memref<8x128xf32, #tpu.memory_space<vmem>>, vector<8x128xf32>
    %c0_1 = arith.constant 0 : index
    %c0_2 = arith.constant 0 : index
    %1 = vector.load %arg1[%c0_1, %c0_2] : memref<128x384xf32, #tpu.memory_space<vmem>>, vector<128x128xf32>
    %c0_3 = arith.constant 0 : index
    %c128 = arith.constant 128 : index
    %2 = vector.load %arg1[%c0_3, %c128] : memref<128x384xf32, #tpu.memory_space<vmem>>, vector<128x128xf32>
    %c0_4 = arith.constant 0 : index
    %c256 = arith.constant 256 : index
    %3 = vector.load %arg1[%c0_4, %c256] : memref<128x384xf32, #tpu.memory_space<vmem>>, vector<128x128xf32>
    %c0_5 = arith.constant 0 : index
    %c0_6 = arith.constant 0 : index
    %4 = vector.load %arg2[%c0_5, %c0_6] : memref<8x128xf32, #tpu.memory_space<vmem>>, vector<8x128xf32>
    %5 = vector.extract_strided_slice %4 {offsets = [0, 0], sizes = [1, 128], strides = [1, 1]} : vector<8x128xf32> to vector<1x128xf32>
    %6 = vector.extract_strided_slice %4 {offsets = [1, 0], sizes = [1, 128], strides = [1, 1]} : vector<8x128xf32> to vector<1x128xf32>
    %7 = vector.extract_strided_slice %4 {offsets = [2, 0], sizes = [1, 128], strides = [1, 1]} : vector<8x128xf32> to vector<1x128xf32>
    %8 = vector.extract_strided_slice %4 {offsets = [3, 0], sizes = [1, 128], strides = [1, 1]} : vector<8x128xf32> to vector<1x128xf32>
    %9 = vector.extract_strided_slice %4 {offsets = [4, 0], sizes = [1, 128], strides = [1, 1]} : vector<8x128xf32> to vector<1x128xf32>
    %cst = arith.constant dense<0.000000e+00> : vector<8x128xf32>
    %10 = tpu.matmul %0, %1, %cst {dimension_numbers = #tpu.dot_dimension_numbers<[1], [0], [0], [1], [0, 0, 1, 1], [], []>} : vector<8x128xf32>, vector<128x128xf32>, vector<8x128xf32> -> vector<8x128xf32>
    %cst_7 = arith.constant dense<0.000000e+00> : vector<128xf32>
    %11 = vector.multi_reduction <add>, %10, %cst_7 [0] : vector<8x128xf32> to vector<128xf32>
    %12 = vector.shape_cast %11 : vector<128xf32> to vector<1x128xf32>
    %cst_8 = arith.constant 1.250000e-01 : f32
    %13 = vector.broadcast %cst_8 : f32 to vector<1x128xf32>
    %14 = arith.mulf %12, %13 : vector<1x128xf32>
    %15 = arith.mulf %10, %10 : vector<8x128xf32>
    %cst_9 = arith.constant dense<0.000000e+00> : vector<128xf32>
    %16 = vector.multi_reduction <add>, %15, %cst_9 [0] : vector<8x128xf32> to vector<128xf32>
    %17 = vector.shape_cast %16 : vector<128xf32> to vector<1x128xf32>
    %cst_10 = arith.constant 1.250000e-01 : f32
    %18 = vector.broadcast %cst_10 : f32 to vector<1x128xf32>
    %19 = arith.mulf %17, %18 : vector<1x128xf32>
    %20 = arith.mulf %14, %14 : vector<1x128xf32>
    %21 = arith.subf %19, %20 : vector<1x128xf32>
    %cst_11 = arith.constant 0.000000e+00 : f32
    %22 = vector.broadcast %cst_11 : f32 to vector<1x128xf32>
    %23 = arith.maximumf %21, %22 : vector<1x128xf32>
    %cst_12 = arith.constant 9.99999974E-6 : f32
    %24 = vector.broadcast %cst_12 : f32 to vector<1x128xf32>
    %25 = arith.addf %23, %24 : vector<1x128xf32>
    %26 = math.rsqrt %25 : vector<1x128xf32>
    %27 = arith.mulf %5, %26 : vector<1x128xf32>
    %28 = arith.mulf %14, %27 : vector<1x128xf32>
    %29 = arith.subf %6, %28 : vector<1x128xf32>
    %30 = vector.broadcast %27 : vector<1x128xf32> to vector<8x128xf32>
    %31 = arith.mulf %10, %30 : vector<8x128xf32>
    %32 = vector.broadcast %29 : vector<1x128xf32> to vector<8x128xf32>
    %33 = arith.addf %31, %32 : vector<8x128xf32>
    %cst_13 = arith.constant 0.000000e+00 : f32
    %34 = vector.broadcast %cst_13 : f32 to vector<8x128xf32>
    %35 = arith.maximumf %33, %34 : vector<8x128xf32>
    %cst_14 = arith.constant dense<0.000000e+00> : vector<8x128xf32>
    %36 = tpu.matmul %35, %2, %cst_14 {dimension_numbers = #tpu.dot_dimension_numbers<[1], [0], [0], [1], [0, 0, 1, 1], [], []>} : vector<8x128xf32>, vector<128x128xf32>, vector<8x128xf32> -> vector<8x128xf32>
    %cst_15 = arith.constant dense<0.000000e+00> : vector<128xf32>
    %37 = vector.multi_reduction <add>, %36, %cst_15 [0] : vector<8x128xf32> to vector<128xf32>
    %38 = vector.shape_cast %37 : vector<128xf32> to vector<1x128xf32>
    %cst_16 = arith.constant 1.250000e-01 : f32
    %39 = vector.broadcast %cst_16 : f32 to vector<1x128xf32>
    %40 = arith.mulf %38, %39 : vector<1x128xf32>
    %41 = arith.mulf %36, %36 : vector<8x128xf32>
    %cst_17 = arith.constant dense<0.000000e+00> : vector<128xf32>
    %42 = vector.multi_reduction <add>, %41, %cst_17 [0] : vector<8x128xf32> to vector<128xf32>
    %43 = vector.shape_cast %42 : vector<128xf32> to vector<1x128xf32>
    %cst_18 = arith.constant 1.250000e-01 : f32
    %44 = vector.broadcast %cst_18 : f32 to vector<1x128xf32>
    %45 = arith.mulf %43, %44 : vector<1x128xf32>
    %46 = arith.mulf %40, %40 : vector<1x128xf32>
    %47 = arith.subf %45, %46 : vector<1x128xf32>
    %cst_19 = arith.constant 0.000000e+00 : f32
    %48 = vector.broadcast %cst_19 : f32 to vector<1x128xf32>
    %49 = arith.maximumf %47, %48 : vector<1x128xf32>
    %cst_20 = arith.constant 9.99999974E-6 : f32
    %50 = vector.broadcast %cst_20 : f32 to vector<1x128xf32>
    %51 = arith.addf %49, %50 : vector<1x128xf32>
    %52 = math.rsqrt %51 : vector<1x128xf32>
    %53 = arith.mulf %7, %52 : vector<1x128xf32>
    %54 = arith.mulf %40, %53 : vector<1x128xf32>
    %55 = arith.subf %8, %54 : vector<1x128xf32>
    %56 = vector.broadcast %53 : vector<1x128xf32> to vector<8x128xf32>
    %57 = arith.mulf %36, %56 : vector<8x128xf32>
    %58 = vector.broadcast %55 : vector<1x128xf32> to vector<8x128xf32>
    %59 = arith.addf %57, %58 : vector<8x128xf32>
    %cst_21 = arith.constant 0.000000e+00 : f32
    %60 = vector.broadcast %cst_21 : f32 to vector<8x128xf32>
    %61 = arith.maximumf %59, %60 : vector<8x128xf32>
    %cst_22 = arith.constant dense<0.000000e+00> : vector<8x128xf32>
    %62 = tpu.matmul %61, %3, %cst_22 {dimension_numbers = #tpu.dot_dimension_numbers<[1], [0], [0], [1], [0, 0, 1, 1], [], []>} : vector<8x128xf32>, vector<128x128xf32>, vector<8x128xf32> -> vector<8x128xf32>
    %63 = vector.broadcast %9 : vector<1x128xf32> to vector<8x128xf32>
    %64 = arith.addf %62, %63 : vector<8x128xf32>
    %c0_23 = arith.constant 0 : index
    %c0_24 = arith.constant 0 : index
    %65 = vector.load %arg3[%c0_23, %c0_24] : memref<8x128xf32, #tpu.memory_space<vmem>>, vector<8x128xf32>
    tpu.vector_store %arg3[%c0_23, %c0_24], %64 {strides = array<i32>} : memref<8x128xf32, #tpu.memory_space<vmem>>, vector<8x128xf32>,
    return
  }
}

</mosaic_0001>

<llo_original>
// kernel: tpu_custom_call.1
$region0: #{tpu_custom_call.1}
  #allocation0 [shape = 'u32[]', space=smem, size = 0x4, offset = 0x4, fixed_abs, tag = 'smem constant byte address 0x4 - core index']
  #allocation1 [shape = 'u32[72,128]{1,0:T(1,128)}', space=vmem, size = 0x9000, scoped, tag = 'internal scratch']
  %s0 = inlined_call_operand.hbm [shape: f32[8,128], index: 0, kind: input, shape index: {}]
  %s1 = inlined_call_operand.hbm [shape: f32[128,384], index: 1, kind: input, shape index: {}]
  %s2 = inlined_call_operand.hbm [shape: f32[8,128], index: 2, kind: input, shape index: {}]
  %s3 = inlined_call_operand.hbm [shape: f32[8,128], index: 3, kind: output, shape index: {}]
  %s4 = sld [smem:[#allocation0]]
  $region34: #{tpu_custom_call.1} parent=0
    _
  %s6 = ssub.s32 1, %s4
  %s7 = scalar_select 0, %s6, %s4
  $region1: #{tpu_custom_call.1} parent=0
    #allocation2 [shape = 'u8[4096]{0}', space=vmem, size = 0x1000, scoped, tag = 'input window, operand 0, single buffered']
    #allocation3 [shape = 's32[1]{0}', space=sflag, size = 0x4, scoped, tag = 'scoped memory for tpu_custom_call.1']
    #allocation4 [shape = 's32[1]{0}', space=sflag, size = 0x4, scoped, tag = 'scoped memory for tpu_custom_call.1']
    #allocation5 [shape = 'u8[196608]{0}', space=vmem, size = 0x30000, scoped, tag = 'input window, operand 1, single buffered']
    #allocation6 [shape = 's32[1]{0}', space=sflag, size = 0x4, scoped, tag = 'scoped memory for tpu_custom_call.1']
    #allocation7 [shape = 'u8[4096]{0}', space=vmem, size = 0x1000, scoped, tag = 'input window, operand 2, single buffered']
    #allocation8 [shape = 'u8[4096]{0}', space=vmem, size = 0x1000, scoped, tag = 'output window, operand 0, single buffered']
    %8 = vsyncpa [#allocation3], 0
    %9 = vsyncpa [#allocation6], 0
    %10 = vsyncpa [#allocation4], 0
    // Predicated region
    $region2: #{tpu_custom_call.1} parent=1 // pred_check
      _
    $region3: #{tpu_custom_call.1} parent=1 // pred_check_branch
      %12 = sbr.rel (0) target = $region5
    $region4: #{tpu_custom_call.1} parent=1 // pred_region
      %14 = vsyncadd [#allocation3], 0
      %s16 = sshll.u32 %s0, 4
      %s17 = int_to_ptr.hbm [resolvable:$true] %s16
      %s18 = sshll.u32 [#allocation2], 4
      %s19 = int_to_ptr.vmem [resolvable:$true] %s18
      %21 = dma.hbm_to_vmem [thread:$0]  %s17, 128, %s19, [#allocation3]
    $region5: #{tpu_custom_call.1} parent=1 // pred_fallthru
      _
    // Predicated region
    $region6: #{tpu_custom_call.1} parent=1 // pred_check
      _
    $region7: #{tpu_custom_call.1} parent=1 // pred_check_branch
      %23 = sbr.rel (0) target = $region9
    $region8: #{tpu_custom_call.1} parent=1 // pred_region
      %25 = vsyncadd [#allocation6], 0
      %s26 = sshll.u32 %s1, 4
      %s27 = int_to_ptr.hbm [resolvable:$true] %s26
      %s28 = sshll.u32 [#allocation5], 4
      %s29 = int_to_ptr.vmem [resolvable:$true] %s28
      %34 = dma.hbm_to_vmem [thread:$0]  %s27, 6144, %s29, [#allocation6], 384, 384, 24
    $region9: #{tpu_custom_call.1} parent=1 // pred_fallthru
      _
    // Predicated region
    $region10: #{tpu_custom_call.1} parent=1 // pred_check
      _
    $region11: #{tpu_custom_call.1} parent=1 // pred_check_branch
      %36 = sbr.rel (0) target = $region13
    $region12: #{tpu_custom_call.1} parent=1 // pred_region
      %38 = vsyncadd [#allocation6], 0
      %s40 = sshll.u32 %s2, 4
      %s41 = int_to_ptr.hbm [resolvable:$true] %s40
      %s42 = sshll.u32 [#allocation7], 4
      %s43 = int_to_ptr.vmem [resolvable:$true] %s42
      %45 = dma.hbm_to_vmem [thread:$0]  %s41, 128, %s43, [#allocation6]
    $region13: #{tpu_custom_call.1} parent=1 // pred_fallthru
      _
    // Predicated region
    $region14: #{tpu_custom_call.1} parent=1 // pred_check
      _
    $region15: #{tpu_custom_call.1} parent=1 // pred_check_branch
      %47 = sbr.rel (0) target = $region17
    $region16: #{tpu_custom_call.1} parent=1 // pred_region
      %49 = dma.done [#allocation3], 128
    $region17: #{tpu_custom_call.1} parent=1 // pred_fallthru
      _
    // Predicated region
    $region18: #{tpu_custom_call.1} parent=1 // pred_check
      _
    $region19: #{tpu_custom_call.1} parent=1 // pred_check_branch
      %51 = sbr.rel (0) target = $region21
    $region20: #{tpu_custom_call.1} parent=1 // pred_region
      %53 = dma.done [#allocation6], 6144
    $region21: #{tpu_custom_call.1} parent=1 // pred_fallthru
      _
    // Predicated region
    $region22: #{tpu_custom_call.1} parent=1 // pred_check
      _
    $region23: #{tpu_custom_call.1} parent=1 // pred_check_branch
      %55 = sbr.rel (0) target = $region25
    $region24: #{tpu_custom_call.1} parent=1 // pred_region
      %57 = dma.done [#allocation6], 128
    $region25: #{tpu_custom_call.1} parent=1 // pred_fallthru
      _
    %v58 = vld [vmem:[#allocation2] sm:$0xff]
    %v59 = vld [vmem:[#allocation5] sm:$0xff]
    %v60 = vld [vmem:[#allocation5 + $0x18] sm:$0xff]
    %v61 = vld [vmem:[#allocation5 + $0x30] sm:$0xff]
    %v62 = vld [vmem:[#allocation5 + $0x48] sm:$0xff]
    %v63 = vld [vmem:[#allocation5 + $0x60] sm:$0xff]
    %v64 = vld [vmem:[#allocation5 + $0x78] sm:$0xff]
    %v65 = vld [vmem:[#allocation5 + $0x90] sm:$0xff]
    %v66 = vld [vmem:[#allocation5 + $0xa8] sm:$0xff]
    %v67 = vld [vmem:[#allocation5 + $0xc0] sm:$0xff]
    %v68 = vld [vmem:[#allocation5 + $0xd8] sm:$0xff]
    %v69 = vld [vmem:[#allocation5 + $0xf0] sm:$0xff]
    %v70 = vld [vmem:[#allocation5 + $0x108] sm:$0xff]
    %v71 = vld [vmem:[#allocation5 + $0x120] sm:$0xff]
    %v72 = vld [vmem:[#allocation5 + $0x138] sm:$0xff]
    %v73 = vld [vmem:[#allocation5 + $0x150] sm:$0xff]
    %v74 = vld [vmem:[#allocation5 + $0x168] sm:$0xff]
    %v75 = vld [vmem:[#allocation5 + $0x8] sm:$0xff]
    %v76 = vld [vmem:[#allocation5 + $0x20] sm:$0xff]
    %v77 = vld [vmem:[#allocation5 + $0x38] sm:$0xff]
    %v78 = vld [vmem:[#allocation5 + $0x50] sm:$0xff]
    %v79 = vld [vmem:[#allocation5 + $0x68] sm:$0xff]
    %v80 = vld [vmem:[#allocation5 + $0x80] sm:$0xff]
    %v81 = vld [vmem:[#allocation5 + $0x98] sm:$0xff]
    %v82 = vld [vmem:[#allocation5 + $0xb0] sm:$0xff]
    %v83 = vld [vmem:[#allocation5 + $0xc8] sm:$0xff]
    %v84 = vld [vmem:[#allocation5 + $0xe0] sm:$0xff]
    %v85 = vld [vmem:[#allocation5 + $0xf8] sm:$0xff]
    %v86 = vld [vmem:[#allocation5 + $0x110] sm:$0xff]
    %v87 = vld [vmem:[#allocation5 + $0x128] sm:$0xff]
    %v88 = vld [vmem:[#allocation5 + $0x140] sm:$0xff]
    %v89 = vld [vmem:[#allocation5 + $0x158] sm:$0xff]
    %v90 = vld [vmem:[#allocation5 + $0x170] sm:$0xff]
    %v91 = vld [vmem:[#allocation5 + $0x10] sm:$0xff]
    %v92 = vld [vmem:[#allocation5 + $0x28] sm:$0xff]
    %v93 = vld [vmem:[#allocation5 + $0x40] sm:$0xff]
    %v94 = vld [vmem:[#allocation5 + $0x58] sm:$0xff]
    %v95 = vld [vmem:[#allocation5 + $0x70] sm:$0xff]
    %v96 = vld [vmem:[#allocation5 + $0x88] sm:$0xff]
    %v97 = vld [vmem:[#allocation5 + $0xa0] sm:$0xff]
    %v98 = vld [vmem:[#allocation5 + $0xb8] sm:$0xff]
    %v99 = vld [vmem:[#allocation5 + $0xd0] sm:$0xff]
    %v100 = vld [vmem:[#allocation5 + $0xe8] sm:$0xff]
    %v101 = vld [vmem:[#allocation5 + $0x100] sm:$0xff]
    %v102 = vld [vmem:[#allocation5 + $0x118] sm:$0xff]
    %v103 = vld [vmem:[#allocation5 + $0x130] sm:$0xff]
    %v104 = vld [vmem:[#allocation5 + $0x148] sm:$0xff]
    %v105 = vld [vmem:[#allocation5 + $0x160] sm:$0xff]
    %v106 = vld [vmem:[#allocation5 + $0x178] sm:$0xff]
    %v107 = vld [vmem:[#allocation7] sm:$0xff]
    %108 = vmatpush.msra.mxu0 %v74
    %109 = vmatpush.msra.mxu0 %v73
    %110 = vmatpush.msra.mxu0 %v72
    %111 = vmatpush.msra.mxu0 %v71
    %112 = vmatpush.msra.mxu0 %v70
    %113 = vmatpush.msra.mxu0 %v69
    %114 = vmatpush.msra.mxu0 %v68
    %115 = vmatpush.msra.mxu0 %v67
    %116 = vmatpush.msra.mxu0 %v66
    %117 = vmatpush.msra.mxu0 %v65
    %118 = vmatpush.msra.mxu0 %v64
    %119 = vmatpush.msra.mxu0 %v63
    %120 = vmatpush.msra.mxu0 %v62
    %121 = vmatpush.msra.mxu0 %v61
    %122 = vmatpush.msra.mxu0 %v60
    %123 = vmatpush.msra.mxu0 %v59
    %124 = vmatmul.f32.gmra.mxu0 %v58
    %v125 = vpop.f32.mrf.mxu0
    %v126 = vadd.f32 0.0, %v125
    %127 = vdwg.mxu0
    %v128 = vrot.slane %v126, 4
    %v129 = vadd.f32 %v126, %v128
    %v130 = vrot.slane %v129, 2
    %v131 = vadd.f32 %v129, %v130
    %v132 = vrot.slane %v131, 1
    %v133 = vadd.f32 %v131, %v132
    %v134 = vmul.f32 %v133, 0.125
    %v135 = vmul.f32 %v126, %v126
    %v136 = vrot.slane %v135, 4
    %v137 = vadd.f32 %v135, %v136
    %v138 = vrot.slane %v137, 2
    %v139 = vadd.f32 %v137, %v138
    %v140 = vrot.slane %v139, 1
    %v141 = vadd.f32 %v139, %v140
    %v142 = vmul.f32 %v141, 0.125
    %v143 = vmul.f32 %v134, %v134
    %v144 = vsub.f32 %v142, %v143
    %v145 = vmax.f32 %v144, 0.0
    %v146 = vadd.f32 %v145, 1e-05
    %v147 = vrsqrt.pop %v146
    %v148 = vmul.f32 %v147, %v146
    %v149 = vmul.f32 %v148, %v147
    %v150 = vmul.f32 0.5, %v149
    %v151 = vsub.f32 1.5, %v150
    %v152 = vmul.f32 %v147, %v151
    %vm153 = vweird.f32 %v146
    %vm154 = vweird.f32 %v147
    %vm155 = vmor %vm153, %vm154
    %v156 = vsel %vm155, %v147, %v152
    %v157 = vmul.f32 %v107, %v156
    %v158 = vmul.f32 %v134, %v157
    %v160 = vrot.slane %v158, 7
    %v162 = vsub.f32 %v107, %v160
    %v163 = vperm.slane %v157, 0
    %v164 = vmul.f32 %v126, %v163
    %v165 = vperm.slane %v162, 1
    %v166 = vadd.f32 %v164, %v165
    %v167 = vmax.f32 %v166, 0.0
    %168 = vmatpush.msra.mxu0 %v90
    %169 = vmatpush.msra.mxu0 %v89
    %170 = vmatpush.msra.mxu0 %v88
    %171 = vmatpush.msra.mxu0 %v87
    %172 = vmatpush.msra.mxu0 %v86
    %173 = vmatpush.msra.mxu0 %v85
    %174 = vmatpush.msra.mxu0 %v84
    %175 = vmatpush.msra.mxu0 %v83
    %176 = vmatpush.msra.mxu0 %v82
    %177 = vmatpush.msra.mxu0 %v81
    %178 = vmatpush.msra.mxu0 %v80
    %179 = vmatpush.msra.mxu0 %v79
    %180 = vmatpush.msra.mxu0 %v78
    %181 = vmatpush.msra.mxu0 %v77
    %182 = vmatpush.msra.mxu0 %v76
    %183 = vmatpush.msra.mxu0 %v75
    %184 = vmatmul.f32.gmra.mxu0 %v167
    %v185 = vpop.f32.mrf.mxu0
    %v186 = vadd.f32 0.0, %v185
    %187 = vdwg.mxu0
    %v188 = vrot.slane %v186, 4
    %v189 = vadd.f32 %v186, %v188
    %v190 = vrot.slane %v189, 2
    %v191 = vadd.f32 %v189, %v190
    %v192 = vrot.slane %v191, 1
    %v193 = vadd.f32 %v191, %v192
    %v194 = vmul.f32 %v193, 0.125
    %v195 = vmul.f32 %v186, %v186
    %v196 = vrot.slane %v195, 4
    %v197 = vadd.f32 %v195, %v196
    %v198 = vrot.slane %v197, 2
    %v199 = vadd.f32 %v197, %v198
    %v200 = vrot.slane %v199, 1
    %v201 = vadd.f32 %v199, %v200
    %v202 = vmul.f32 %v201, 0.125
    %v203 = vmul.f32 %v194, %v194
    %v204 = vsub.f32 %v202, %v203
    %v205 = vmax.f32 %v204, 0.0
    %v206 = vadd.f32 %v205, 1e-05
    %v207 = vrsqrt.pop %v206
    %v208 = vmul.f32 %v207, %v206
    %v209 = vmul.f32 %v208, %v207
    %v210 = vmul.f32 0.5, %v209
    %v211 = vsub.f32 1.5, %v210
    %v212 = vmul.f32 %v207, %v211
    %vm213 = vweird.f32 %v206
    %vm214 = vweird.f32 %v207
    %vm215 = vmor %vm213, %vm214
    %v216 = vsel %vm215, %v207, %v212
    %v217 = vmul.f32 %v107, %v216
    %v218 = vmul.f32 %v194, %v217
    %v220 = vrot.slane %v218, 7
    %v222 = vsub.f32 %v107, %v220
    %v223 = vperm.slane %v217, 2
    %v224 = vmul.f32 %v186, %v223
    %v225 = vperm.slane %v222, 3
    %v226 = vadd.f32 %v224, %v225
    %v227 = vmax.f32 %v226, 0.0
    %v228 = vperm.slane %v107, 4
    %229 = vmatpush.msra.mxu0 %v106
    %230 = vmatpush.msra.mxu0 %v105
    %231 = vmatpush.msra.mxu0 %v104
    %232 = vmatpush.msra.mxu0 %v103
    %233 = vmatpush.msra.mxu0 %v102
    %234 = vmatpush.msra.mxu0 %v101
    %235 = vmatpush.msra.mxu0 %v100
    %236 = vmatpush.msra.mxu0 %v99
    %237 = vmatpush.msra.mxu0 %v98
    %238 = vmatpush.msra.mxu0 %v97
    %239 = vmatpush.msra.mxu0 %v96
    %240 = vmatpush.msra.mxu0 %v95
    %241 = vmatpush.msra.mxu0 %v94
    %242 = vmatpush.msra.mxu0 %v93
    %243 = vmatpush.msra.mxu0 %v92
    %244 = vmatpush.msra.mxu0 %v91
    %245 = vmatmul.f32.gmra.mxu0 %v227
    %v246 = vpop.f32.mrf.mxu0
    %v247 = vadd.f32 %v228, %v246
    %248 = vdwg.mxu0
    %249 = vst [vmem:[#allocation8] sm:$0xff] %v247
    // Predicated region
    $region26: #{tpu_custom_call.1} parent=1 // pred_check
      _
    $region27: #{tpu_custom_call.1} parent=1 // pred_check_branch
      %251 = sbr.rel (0) target = $region29
    $region28: #{tpu_custom_call.1} parent=1 // pred_region
      %253 = vsyncadd [#allocation4], 0
      %s255 = sshll.u32 [#allocation8], 4
      %s256 = int_to_ptr.vmem [resolvable:$true] %s255
      %s257 = sshll.u32 %s3, 4
      %s258 = int_to_ptr.hbm [resolvable:$true] %s257
      %260 = dma.vmem_to_hbm [thread:$0]  %s256, 128, %s258, [#allocation4]
    $region29: #{tpu_custom_call.1} parent=1 // pred_fallthru
      _
    // Predicated region
    $region30: #{tpu_custom_call.1} parent=1 // pred_check
      _
    $region31: #{tpu_custom_call.1} parent=1 // pred_check_branch
      %262 = sbr.rel (0) target = $region33
    $region32: #{tpu_custom_call.1} parent=1 // pred_region
      %264 = dma.done [#allocation4], 128
    $region33: #{tpu_custom_call.1} parent=1 // pred_fallthru
      _
    %265 = vsyncpa [#allocation3], 1
    %266 = vsyncpa [#allocation6], 1
    %267 = vsyncpa [#allocation4], 1

</llo_original>
